<compile_context>
chip_gen: v7x
topology: tpu7x:2x2x1
jax: 0.10.0
libtpu: 0.0.40
codegen_flags: <defaults>
</compile_context>

<pallas_src>
import jax
import jax.numpy as jnp
from jax.experimental import pallas as pl
from jax.experimental.pallas import tpu as pltpu


N_FEATURES = 115               # n_neurons_in in the PyTorch module
HIDDEN_LAYERS = [64, 32, 64]   # example hidden_layers config
F_PAD = 128                    # lane-padded FINAL-layer output width
TB_MAX = 2048                  # max batch tile (per-step overhead ~0.35us -> keep tiles big)


def _round_up(x, m):
    return ((x + m - 1) // m) * m


def _tensorcores_per_chip():
    """2 TensorCores on v7x (and megacore v4/v5p), 1 on v5e/v6e."""
    try:
        kind = jax.devices()[0].device_kind.lower()
    except Exception:
        return 1
    if "v7" in kind or "v4" in kind or "v5p" in kind:
        return 2
    return 1


def pick_batch_tile(batch, tb_max=TB_MAX, num_cores=None):
    """Per-generation batch-tile policy.

    Single-TC (v5e/v6e): the biggest sublane-aligned tile that covers the
    batch (never split a batch that fits one tile -- splitting only adds
    ~0.35us of step overhead per extra step with zero parallelism gain).

    Dual-TC (v7x): smallest EVEN number of grid steps such that each step's
    tile is <= tb_max, so both TensorCores get equal work under
    dimension_semantics=("parallel",).
    """
    if num_cores is None:
        num_cores = _tensorcores_per_chip()
    if num_cores <= 1:
        return max(8, min(_round_up(batch, 8), tb_max))
    # dual-TC: even step count, balanced tiles
    n_steps = 2 * pl.cdiv(batch, 2 * tb_max)
    tb = _round_up(pl.cdiv(batch, n_steps), 8)
    return max(8, min(tb, tb_max))


def make_mlp_kernel(num_layers, activation=lambda h: jnp.maximum(h, 0.0)):
    """Fused MLP kernel.  refs = (x, w0, b0, w1, b1, ..., out).

    Weights arrive as bf16 (in, out); biases as f32 (1, out).  Matmuls run
    bf16 x bf16 -> f32 accumulation on the MXU; bias add / activation stay in
    f32.  Only the final layer's output is lane-padded to 128, and it has no
    activation, so `activation` (the PyTorch activation_function, default
    ReLU) can be any elementwise function without breaking the zero padding.
    """
    def kernel(*refs):
        x_ref = refs[0]
        o_ref = refs[-1]
        h = x_ref[...]                                        # (TB, 115) f32
        for i in range(num_layers):
            w = refs[1 + 2 * i][...]                          # (K_i, N_i) bf16
            b = refs[2 + 2 * i][...]                          # (1,  N_i) f32
            h = jnp.dot(h.astype(jnp.bfloat16), w,
                        preferred_element_type=jnp.float32) + b
            if i < num_layers - 1:                            # hidden layers only
                h = activation(h)
        o_ref[...] = h                                        # (TB, 128) lane-dense f32
    return kernel


def init_params(key, hidden_layers, n_features):
    """Deterministic Linear params in (in, out) layout; PyTorch-style uniform init."""
    dims = [n_features] + list(hidden_layers) + [n_features]
    params = []
    for i in range(len(dims) - 1):
        n_in, n_out = dims[i], dims[i + 1]
        key, kw, kb = jax.random.split(key, 3)
        bound = 1.0 / jnp.sqrt(jnp.float32(n_in))
        w = jax.random.uniform(kw, (n_in, n_out), jnp.float32, -bound, bound)
        b = jax.random.uniform(kb, (n_out,), jnp.float32, -bound, bound)
        params.append((w, b))
    return params


def prepare_params(params):
    """Kernel-side param prep (done once, outside the per-call hot path):

      * weights cast to bf16 in (in, out) layout -> native MXU operand dtype;
      * biases kept f32, reshaped to (1, out) for sublane broadcast;
      * ONLY the final layer's output width padded to 128 lanes with zero
        weight columns / zero bias (hidden layers keep true widths, so no
        MXU work is spent on zero contraction rows).
    """
    n = len(params)
    prepped = []
    for li, (w, b) in enumerate(params):
        n_in, n_out = w.shape
        if li == n - 1:
            w_p = jnp.zeros((n_in, F_PAD), jnp.float32).at[:, :n_out].set(w)
            b_p = jnp.zeros((1, F_PAD), jnp.float32).at[0, :n_out].set(b)
        else:
            w_p = w
            b_p = b.reshape(1, n_out)
        prepped += [w_p.astype(jnp.bfloat16), b_p.astype(jnp.float32)]
    return prepped


def autoencoder_forward(x, prepped_params, *, return_padded=False):
    """x: (B, 115) float32 -> (B, 115) float32 (or (B, 128) padded slab).

    Prefer return_padded=True when the consumer tolerates 128-lane slabs
    (columns 115: are exactly zero); the default (module semantics) adds a
    standalone XLA slice pass that re-reads/re-writes the output stream.
    """
    B, F = x.shape
    assert F == N_FEATURES
    num_layers = len(prepped_params) // 2

    TB = pick_batch_tile(B)
    grid = (pl.cdiv(B, TB),)

    # x streamed per batch tile; full (115-wide) last dim -> no wrapper pad.
    in_specs = [pl.BlockSpec((TB, F), lambda i: (i, 0))]
    # Weights/biases: constant-index full-array blocks -> loaded once, stay in
    # VMEM across the whole batch grid (not re-DMA'd per step).
    for w_p, b_p in zip(prepped_params[0::2], prepped_params[1::2]):
        in_specs += [
            pl.BlockSpec(w_p.shape, lambda i: (0, 0)),
            pl.BlockSpec(b_p.shape, lambda i: (0, 0)),
        ]

    out_padded = pl.pallas_call(
        make_mlp_kernel(num_layers),
        out_shape=jax.ShapeDtypeStruct((B, F_PAD), jnp.float32),
        grid_spec=pltpu.PrefetchScalarGridSpec(
            num_scalar_prefetch=0,
            grid=grid,
            in_specs=in_specs,
            out_specs=pl.BlockSpec((TB, F_PAD), lambda i: (i, 0)),
        ),
        compiler_params=pltpu.CompilerParams(
            dimension_semantics=("parallel",),
            # 32 MiB: default on v6e/v7x, raises v5e's 16 MiB default so the
            # 2048-row tile recommendation never trips the scoped limit.
            vmem_limit_bytes=32 * 1024 * 1024,
        ),
    )(x, *prepped_params)

    if return_padded:
        return out_padded
    return out_padded[:, :N_FEATURES]


def reference_forward(x, params):
    """Exact f32 reference matching the PyTorch module (default nn.ReLU)."""
    h = x
    n = len(params)
    for i, (w, b) in enumerate(params):
        h = h @ w + b
        if i < n - 1:
            h = jnp.maximum(h, 0.0)
    return h


if __name__ == "__main__":
    key = jax.random.PRNGKey(0)
    kx, kp = jax.random.split(key)
    B = 16
    x = jax.random.normal(kx, (B, N_FEATURES), jnp.float32)
    params = init_params(kp, HIDDEN_LAYERS, N_FEATURES)
    prepped_params = prepare_params(params)

    y = autoencoder_forward(x, prepped_params)
    y = jax.block_until_ready(y)

    y_ref = reference_forward(x, params)
    assert y.shape == (B, N_FEATURES)
    # bf16 matmul operands with f32 accumulation -> ~1e-2-scale tolerance.
    assert jnp.allclose(y, y_ref, atol=2e-2, rtol=2e-2), "mismatch vs reference"

    # Padded-slab path (lane-dense output, no trailing slice pass): extra
    # columns are exactly zero (zero bf16 weight columns, zero f32 bias).
    y_pad = jax.block_until_ready(
        autoencoder_forward(x, prepped_params, return_padded=True))
    assert y_pad.shape == (B, F_PAD)
    assert jnp.allclose(y_pad[:, :N_FEATURES], y_ref, atol=2e-2, rtol=2e-2)
    assert jnp.all(jnp.abs(y_pad[:, N_FEATURES:]) < 1e-6)

    print("KERNEL_OK")
</pallas_src>

<mosaic_0001>
module attributes {stable_mosaic.version = 11 : i64} {
  func.func @kernel(%arg0: i32, %arg1: memref<16x115xf32, #tpu.memory_space<vmem>>, %arg2: memref<115x64xbf16, #tpu.memory_space<vmem>>, %arg3: memref<1x64xf32, #tpu.memory_space<vmem>>, %arg4: memref<64x32xbf16, #tpu.memory_space<vmem>>, %arg5: memref<1x32xf32, #tpu.memory_space<vmem>>, %arg6: memref<32x64xbf16, #tpu.memory_space<vmem>>, %arg7: memref<1x64xf32, #tpu.memory_space<vmem>>, %arg8: memref<64x128xbf16, #tpu.memory_space<vmem>>, %arg9: memref<1x128xf32, #tpu.memory_space<vmem>>, %arg10: memref<16x128xf32, #tpu.memory_space<vmem>>) attributes {dimension_semantics = [#tpu.dimension_semantics<parallel>], iteration_bounds = array<i64: 1>, scalar_prefetch = 0 : i64, scratch_operands = 0 : i64, tpu.core_type = #tpu.core_type<tc>, window_params = [{transform_indices = @transform_0, window_bounds = array<i64: 16, 115>}, {pipeline_mode = #tpu.pipeline_mode<synchronous>, transform_indices = @transform_1, window_bounds = array<i64: 115, 64>}, {pipeline_mode = #tpu.pipeline_mode<synchronous>, transform_indices = @transform_2, window_bounds = array<i64: 1, 64>}, {pipeline_mode = #tpu.pipeline_mode<synchronous>, transform_indices = @transform_3, window_bounds = array<i64: 64, 32>}, {pipeline_mode = #tpu.pipeline_mode<synchronous>, transform_indices = @transform_4, window_bounds = array<i64: 1, 32>}, {pipeline_mode = #tpu.pipeline_mode<synchronous>, transform_indices = @transform_5, window_bounds = array<i64: 32, 64>}, {pipeline_mode = #tpu.pipeline_mode<synchronous>, transform_indices = @transform_6, window_bounds = array<i64: 1, 64>}, {pipeline_mode = #tpu.pipeline_mode<synchronous>, transform_indices = @transform_7, window_bounds = array<i64: 64, 128>}, {pipeline_mode = #tpu.pipeline_mode<synchronous>, transform_indices = @transform_8, window_bounds = array<i64: 1, 128>}, {transform_indices = @transform_9, window_bounds = array<i64: 16, 128>}]} {
    %c0 = arith.constant 0 : index
    %c0_0 = arith.constant 0 : index
    %0 = vector.load %arg1[%c0, %c0_0] : memref<16x115xf32, #tpu.memory_space<vmem>>, vector<16x115xf32>
    %c0_1 = arith.constant 0 : index
    %c0_2 = arith.constant 0 : index
    %1 = vector.load %arg2[%c0_1, %c0_2] : memref<115x64xbf16, #tpu.memory_space<vmem>>, vector<115x64xbf16>
    %c0_3 = arith.constant 0 : index
    %c0_4 = arith.constant 0 : index
    %2 = vector.load %arg3[%c0_3, %c0_4] : memref<1x64xf32, #tpu.memory_space<vmem>>, vector<1x64xf32>
    %3 = arith.truncf %0 : vector<16x115xf32> to vector<16x115xbf16>
    %cst = arith.constant dense<0.000000e+00> : vector<16x64xf32>
    %4 = tpu.matmul %3, %1, %cst {dimension_numbers = #tpu.dot_dimension_numbers<[1], [0], [0], [1], [0, 0, 1, 1], [], []>} : vector<16x115xbf16>, vector<115x64xbf16>, vector<16x64xf32> -> vector<16x64xf32>
    %5 = vector.broadcast %2 : vector<1x64xf32> to vector<16x64xf32>
    %6 = arith.addf %4, %5 : vector<16x64xf32>
    %cst_5 = arith.constant 0.000000e+00 : f32
    %7 = vector.broadcast %cst_5 : f32 to vector<16x64xf32>
    %8 = arith.maximumf %6, %7 : vector<16x64xf32>
    %c0_6 = arith.constant 0 : index
    %c0_7 = arith.constant 0 : index
    %9 = vector.load %arg4[%c0_6, %c0_7] : memref<64x32xbf16, #tpu.memory_space<vmem>>, vector<64x32xbf16>
    %c0_8 = arith.constant 0 : index
    %c0_9 = arith.constant 0 : index
    %10 = vector.load %arg5[%c0_8, %c0_9] : memref<1x32xf32, #tpu.memory_space<vmem>>, vector<1x32xf32>
    %11 = arith.truncf %8 : vector<16x64xf32> to vector<16x64xbf16>
    %cst_10 = arith.constant dense<0.000000e+00> : vector<16x32xf32>
    %12 = tpu.matmul %11, %9, %cst_10 {dimension_numbers = #tpu.dot_dimension_numbers<[1], [0], [0], [1], [0, 0, 1, 1], [], []>} : vector<16x64xbf16>, vector<64x32xbf16>, vector<16x32xf32> -> vector<16x32xf32>
    %13 = vector.broadcast %10 : vector<1x32xf32> to vector<16x32xf32>
    %14 = arith.addf %12, %13 : vector<16x32xf32>
    %cst_11 = arith.constant 0.000000e+00 : f32
    %15 = vector.broadcast %cst_11 : f32 to vector<16x32xf32>
    %16 = arith.maximumf %14, %15 : vector<16x32xf32>
    %c0_12 = arith.constant 0 : index
    %c0_13 = arith.constant 0 : index
    %17 = vector.load %arg6[%c0_12, %c0_13] : memref<32x64xbf16, #tpu.memory_space<vmem>>, vector<32x64xbf16>
    %c0_14 = arith.constant 0 : index
    %c0_15 = arith.constant 0 : index
    %18 = vector.load %arg7[%c0_14, %c0_15] : memref<1x64xf32, #tpu.memory_space<vmem>>, vector<1x64xf32>
    %19 = arith.truncf %16 : vector<16x32xf32> to vector<16x32xbf16>
    %cst_16 = arith.constant dense<0.000000e+00> : vector<16x64xf32>
    %20 = tpu.matmul %19, %17, %cst_16 {dimension_numbers = #tpu.dot_dimension_numbers<[1], [0], [0], [1], [0, 0, 1, 1], [], []>} : vector<16x32xbf16>, vector<32x64xbf16>, vector<16x64xf32> -> vector<16x64xf32>
    %21 = vector.broadcast %18 : vector<1x64xf32> to vector<16x64xf32>
    %22 = arith.addf %20, %21 : vector<16x64xf32>
    %cst_17 = arith.constant 0.000000e+00 : f32
    %23 = vector.broadcast %cst_17 : f32 to vector<16x64xf32>
    %24 = arith.maximumf %22, %23 : vector<16x64xf32>
    %c0_18 = arith.constant 0 : index
    %c0_19 = arith.constant 0 : index
    %25 = vector.load %arg8[%c0_18, %c0_19] : memref<64x128xbf16, #tpu.memory_space<vmem>>, vector<64x128xbf16>
    %c0_20 = arith.constant 0 : index
    %c0_21 = arith.constant 0 : index
    %26 = vector.load %arg9[%c0_20, %c0_21] : memref<1x128xf32, #tpu.memory_space<vmem>>, vector<1x128xf32>
    %27 = arith.truncf %24 : vector<16x64xf32> to vector<16x64xbf16>
    %cst_22 = arith.constant dense<0.000000e+00> : vector<16x128xf32>
    %28 = tpu.matmul %27, %25, %cst_22 {dimension_numbers = #tpu.dot_dimension_numbers<[1], [0], [0], [1], [0, 0, 1, 1], [], []>} : vector<16x64xbf16>, vector<64x128xbf16>, vector<16x128xf32> -> vector<16x128xf32>
    %29 = vector.broadcast %26 : vector<1x128xf32> to vector<16x128xf32>
    %30 = arith.addf %28, %29 : vector<16x128xf32>
    %c0_23 = arith.constant 0 : index
    %c0_24 = arith.constant 0 : index
    %31 = vector.load %arg10[%c0_23, %c0_24] : memref<16x128xf32, #tpu.memory_space<vmem>>, vector<16x128xf32>
    tpu.vector_store %arg10[%c0_23, %c0_24], %30 {strides = array<i32>} : memref<16x128xf32, #tpu.memory_space<vmem>>, vector<16x128xf32>,
    return
  }
  func.func @transform_0(%arg0: i32) -> (i32, i32) {
    %c0_i32 = arith.constant 0 : i32
    %c0_i32_0 = arith.constant 0 : i32
    return %arg0, %c0_i32 : i32, i32
  }
  func.func @transform_1(%arg0: i32) -> (i32, i32) {
    %c0_i32 = arith.constant 0 : i32
    %c0_i32_0 = arith.constant 0 : i32
    %c0_i32_1 = arith.constant 0 : i32
    return %c0_i32, %c0_i32_0 : i32, i32
  }
  func.func @transform_2(%arg0: i32) -> (i32, i32) {
    %c0_i32 = arith.constant 0 : i32
    %c0_i32_0 = arith.constant 0 : i32
    %c0_i32_1 = arith.constant 0 : i32
    return %c0_i32, %c0_i32_0 : i32, i32
  }
  func.func @transform_3(%arg0: i32) -> (i32, i32) {
    %c0_i32 = arith.constant 0 : i32
    %c0_i32_0 = arith.constant 0 : i32
    %c0_i32_1 = arith.constant 0 : i32
    return %c0_i32, %c0_i32_0 : i32, i32
  }
  func.func @transform_4(%arg0: i32) -> (i32, i32) {
    %c0_i32 = arith.constant 0 : i32
    %c0_i32_0 = arith.constant 0 : i32
    %c0_i32_1 = arith.constant 0 : i32
    return %c0_i32, %c0_i32_0 : i32, i32
  }
  func.func @transform_5(%arg0: i32) -> (i32, i32) {
    %c0_i32 = arith.constant 0 : i32
    %c0_i32_0 = arith.constant 0 : i32
    %c0_i32_1 = arith.constant 0 : i32
    return %c0_i32, %c0_i32_0 : i32, i32
  }
  func.func @transform_6(%arg0: i32) -> (i32, i32) {
    %c0_i32 = arith.constant 0 : i32
    %c0_i32_0 = arith.constant 0 : i32
    %c0_i32_1 = arith.constant 0 : i32
    return %c0_i32, %c0_i32_0 : i32, i32
  }
  func.func @transform_7(%arg0: i32) -> (i32, i32) {
    %c0_i32 = arith.constant 0 : i32
    %c0_i32_0 = arith.constant 0 : i32
    %c0_i32_1 = arith.constant 0 : i32
    return %c0_i32, %c0_i32_0 : i32, i32
  }
  func.func @transform_8(%arg0: i32) -> (i32, i32) {
    %c0_i32 = arith.constant 0 : i32
    %c0_i32_0 = arith.constant 0 : i32
    %c0_i32_1 = arith.constant 0 : i32
    return %c0_i32, %c0_i32_0 : i32, i32
  }
  func.func @transform_9(%arg0: i32) -> (i32, i32) {
    %c0_i32 = arith.constant 0 : i32
    %c0_i32_0 = arith.constant 0 : i32
    return %arg0, %c0_i32 : i32, i32
  }
}

</mosaic_0001>

<llo_original>
// kernel: tpu_custom_call.1
$region0: #{tpu_custom_call.1}
  #allocation0 [shape = 'u32[]', space=smem, size = 0x4, offset = 0x4, fixed_abs, tag = 'smem constant byte address 0x4 - core index']
  #allocation1 [shape = 'u32[144,128]{1,0:T(1,128)}', space=vmem, size = 0x12000, scoped, tag = 'internal scratch']
  %s0 = inlined_call_operand.vmem [shape: f32[16,115], index: 0, kind: input, shape index: {}]
  %s1 = inlined_call_operand.vmem [shape: bf16[115,64], index: 1, kind: input, shape index: {}]
  %s2 = inlined_call_operand.vmem [shape: f32[1,64], index: 2, kind: input, shape index: {}]
  %s3 = inlined_call_operand.vmem [shape: bf16[64,32], index: 3, kind: input, shape index: {}]
  %s4 = inlined_call_operand.vmem [shape: f32[1,32], index: 4, kind: input, shape index: {}]
  %s5 = inlined_call_operand.vmem [shape: bf16[32,64], index: 5, kind: input, shape index: {}]
  %s6 = inlined_call_operand.vmem [shape: f32[1,64], index: 6, kind: input, shape index: {}]
  %s7 = inlined_call_operand.vmem [shape: bf16[64,128], index: 7, kind: input, shape index: {}]
  %s8 = inlined_call_operand.vmem [shape: f32[1,128], index: 8, kind: input, shape index: {}]
  %s9 = inlined_call_operand.hbm [shape: f32[16,128], index: 9, kind: output, shape index: {}]
  %s10 = sld [smem:[#allocation0]]
  $region46: #{tpu_custom_call.1} parent=0
    _
  %s12 = ssub.s32 1, %s10
  %s13 = scalar_select 0, %s12, %s10
  $region1: #{tpu_custom_call.1} parent=0
    #allocation2 [shape = 'u8[8192]{0}', space=vmem, size = 0x2000, scoped, tag = 'output window, operand 0, single buffered']
    #allocation3 [shape = 's32[1]{0}', space=sflag, size = 0x4, scoped, tag = 'scoped memory for tpu_custom_call.1']
    %14 = vsyncpa [#allocation3], 0
    // Predicated region
    $region2: #{tpu_custom_call.1} parent=1 // pred_check
      _
    $region3: #{tpu_custom_call.1} parent=1 // pred_check_branch
      %16 = sbr.rel (0) target = $region5
    $region4: #{tpu_custom_call.1} parent=1 // pred_region
      _
    $region5: #{tpu_custom_call.1} parent=1 // pred_fallthru
      _
    // Predicated region
    $region6: #{tpu_custom_call.1} parent=1 // pred_check
      _
    $region7: #{tpu_custom_call.1} parent=1 // pred_check_branch
      %18 = sbr.rel (0) target = $region9
    $region8: #{tpu_custom_call.1} parent=1 // pred_region
      _
    $region9: #{tpu_custom_call.1} parent=1 // pred_fallthru
      _
    // Predicated region
    $region10: #{tpu_custom_call.1} parent=1 // pred_check
      _
    $region11: #{tpu_custom_call.1} parent=1 // pred_check_branch
      %20 = sbr.rel (0) target = $region13
    $region12: #{tpu_custom_call.1} parent=1 // pred_region
      _
    $region13: #{tpu_custom_call.1} parent=1 // pred_fallthru
      _
    // Predicated region
    $region14: #{tpu_custom_call.1} parent=1 // pred_check
      _
    $region15: #{tpu_custom_call.1} parent=1 // pred_check_branch
      %22 = sbr.rel (0) target = $region17
    $region16: #{tpu_custom_call.1} parent=1 // pred_region
      _
    $region17: #{tpu_custom_call.1} parent=1 // pred_fallthru
      _
    // Predicated region
    $region18: #{tpu_custom_call.1} parent=1 // pred_check
      _
    $region19: #{tpu_custom_call.1} parent=1 // pred_check_branch
      %24 = sbr.rel (0) target = $region21
    $region20: #{tpu_custom_call.1} parent=1 // pred_region
      _
    $region21: #{tpu_custom_call.1} parent=1 // pred_fallthru
      _
    // Predicated region
    $region22: #{tpu_custom_call.1} parent=1 // pred_check
      _
    $region23: #{tpu_custom_call.1} parent=1 // pred_check_branch
      %26 = sbr.rel (0) target = $region25
    $region24: #{tpu_custom_call.1} parent=1 // pred_region
      _
    $region25: #{tpu_custom_call.1} parent=1 // pred_fallthru
      _
    // Predicated region
    $region26: #{tpu_custom_call.1} parent=1 // pred_check
      _
    $region27: #{tpu_custom_call.1} parent=1 // pred_check_branch
      %28 = sbr.rel (0) target = $region29
    $region28: #{tpu_custom_call.1} parent=1 // pred_region
      _
    $region29: #{tpu_custom_call.1} parent=1 // pred_fallthru
      _
    // Predicated region
    $region30: #{tpu_custom_call.1} parent=1 // pred_check
      _
    $region31: #{tpu_custom_call.1} parent=1 // pred_check_branch
      %30 = sbr.rel (0) target = $region33
    $region32: #{tpu_custom_call.1} parent=1 // pred_region
      _
    $region33: #{tpu_custom_call.1} parent=1 // pred_fallthru
      _
    // Predicated region
    $region34: #{tpu_custom_call.1} parent=1 // pred_check
      _
    $region35: #{tpu_custom_call.1} parent=1 // pred_check_branch
      %32 = sbr.rel (0) target = $region37
    $region36: #{tpu_custom_call.1} parent=1 // pred_region
      _
    $region37: #{tpu_custom_call.1} parent=1 // pred_fallthru
      _
    %v34 = vld [vmem:[%s0] sm:$0xff]
    %v35 = vld [vmem:[%s0 + $0x8] sm:$0xff]
    %v36 = vld [vmem:[%s1] sm:$0xf]
    %v37 = vld [vmem:[%s1 + $0x4] sm:$0xf]
    %v38 = vld [vmem:[%s1 + $0x8] sm:$0xf]
    %v39 = vld [vmem:[%s1 + $0xc] sm:$0xf]
    %v40 = vld [vmem:[%s1 + $0x10] sm:$0xf]
    %v41 = vld [vmem:[%s1 + $0x14] sm:$0xf]
    %v42 = vld [vmem:[%s1 + $0x18] sm:$0xf]
    %v43 = vld [vmem:[%s1 + $0x1c] sm:$0xf]
    %v44 = vld [vmem:[%s1 + $0x20] sm:$0xf]
    %v45 = vld [vmem:[%s1 + $0x24] sm:$0xf]
    %v46 = vld [vmem:[%s1 + $0x28] sm:$0xf]
    %v47 = vld [vmem:[%s1 + $0x2c] sm:$0xf]
    %v48 = vld [vmem:[%s1 + $0x30] sm:$0xf]
    %v49 = vld [vmem:[%s1 + $0x34] sm:$0xf]
    %v50 = vld [vmem:[%s1 + $0x38] sm:$0x3]
    %v51 = vld [vmem:[%s2] sm:$0x1]
    %v52 = vpack.c.bf16 %v35, %v34
    %v54 = vlaneseq
    %v55 = vshrl.u32 %v54, 7
    %v56 = vsub.s32 0, %v55
    %v57 = vrot.slane %v51, %v56
    %v74 = vunpack.c.l.b16 %v36
    %v75 = vunpack.c.l.b16 %v37
    %v76 = vunpack.c.l.b16 %v38
    %v77 = vunpack.c.l.b16 %v39
    %v78 = vunpack.c.l.b16 %v40
    %v79 = vunpack.c.l.b16 %v41
    %v80 = vunpack.c.l.b16 %v42
    %v81 = vunpack.c.l.b16 %v43
    %v82 = vunpack.c.l.b16 %v44
    %v83 = vunpack.c.l.b16 %v45
    %v84 = vunpack.c.l.b16 %v46
    %v85 = vunpack.c.l.b16 %v47
    %v86 = vunpack.c.l.b16 %v48
    %v87 = vunpack.c.l.b16 %v49
    %v88 = vunpack.c.l.b16 %v50
    %v89 = vpack.c.b16 %v75, %v74
    %v90 = vpack.c.b16 %v77, %v76
    %v91 = vpack.c.b16 %v79, %v78
    %v92 = vpack.c.b16 %v81, %v80
    %v93 = vpack.c.b16 %v83, %v82
    %v94 = vpack.c.b16 %v85, %v84
    %v95 = vpack.c.b16 %v87, %v86
    %v96 = vpack.c.b16 %v88, %v88
    %vm104 = vcmask 941056
    %v106 = vsel %vm104, %v52, 0
    %vm108 = vcmask 1040384
    %vm109 = vcmask 1041408
    %v110 = vsel %vm108, 4294967295, 65535
    %v111 = vsel %vm109, %v110, 0
    %v113 = vand.u32 %v96, %v111
    %115 = vmatprep.subr.bf16.mxu0 0
    %116 = vmatpush1.bf16.msra.mxu0 %v89
    %117 = vmatprep.subr.bf16.mxu0 0
    %118 = vmatpush1.bf16.msra.mxu0 %v90
    %119 = vmatprep.subr.bf16.mxu0 0
    %120 = vmatpush1.bf16.msra.mxu0 %v91
    %121 = vmatprep.subr.bf16.mxu0 0
    %122 = vmatpush1.bf16.msra.mxu0 %v92
    %123 = vmatprep.subr.bf16.mxu0 0
    %124 = vmatpush1.bf16.msra.mxu0 %v93
    %125 = vmatprep.subr.bf16.mxu0 0
    %126 = vmatpush1.bf16.msra.mxu0 %v94
    %127 = vmatprep.subr.bf16.mxu0 0
    %128 = vmatpush1.bf16.msra.mxu0 %v95
    %129 = vmatprep.subr.bf16.mxu0 0
    %130 = vmatpush1.bf16.msra.mxu0 %v113
    %131 = vmatprep.subr.bf16.mxu0 0
    %132 = vmatpush1.bf16.msra.mxu0 0
    %133 = vmatprep.subr.bf16.mxu0 0
    %134 = vmatpush1.bf16.msra.mxu0 0
    %135 = vmatprep.subr.bf16.mxu0 0
    %136 = vmatpush1.bf16.msra.mxu0 0
    %137 = vmatprep.subr.bf16.mxu0 0
    %138 = vmatpush1.bf16.msra.mxu0 0
    %139 = vmatprep.subr.bf16.mxu0 0
    %140 = vmatpush1.bf16.msra.mxu0 0
    %141 = vmatprep.subr.bf16.mxu0 0
    %142 = vmatpush1.bf16.msra.mxu0 0
    %143 = vmatprep.subr.bf16.mxu0 0
    %144 = vmatpush1.bf16.msra.mxu0 0
    %145 = vmatprep.subr.bf16.mxu0 0
    %146 = vmatpush1.bf16.msra.mxu0 0
    %147 = vmatprep.mubr.bf16.mxu0 0
    %148 = vmatmul.mubr.bf16.gmra.mrb[0].mxu0 %v106
    %v149 = vpop.f32.mrb[0].mxu0
    %v150 = vadd.f32 %v57, %v149
    %v151 = vpop.f32.mrb[0].mxu0
    %v152 = vpop.f32.mrb[0].mxu0
    %v153 = vadd.f32 %v57, %v152
    %v154 = vpop.f32.mrb[0].mxu0
    %155 = vdwg.mxu0
    %v156 = vmax.f32 %v150, 0.0
    %v157 = vmax.f32 %v153, 0.0
    %v158 = vld [vmem:[%s3] sm:$0xf]
    %v159 = vld [vmem:[%s3 + $0x4] sm:$0xf]
    %v160 = vld [vmem:[%s3 + $0x8] sm:$0xf]
    %v161 = vld [vmem:[%s3 + $0xc] sm:$0xf]
    %v162 = vld [vmem:[%s3 + $0x10] sm:$0xf]
    %v163 = vld [vmem:[%s3 + $0x14] sm:$0xf]
    %v164 = vld [vmem:[%s3 + $0x18] sm:$0xf]
    %v165 = vld [vmem:[%s3 + $0x1c] sm:$0xf]
    %v166 = vld [vmem:[%s4] sm:$0x1]
    %v167 = vpack.c.bf16 %v157, %v156
    %v169 = vlaneseq
    %v170 = vshrl.u32 %v169, 7
    %v171 = vsub.s32 0, %v170
    %v172 = vrot.slane %v166, %v171
    %v182 = vunpack.c.l.b16 %v158
    %v183 = vunpack.c.l.b16 %v159
    %v184 = vunpack.c.l.b16 %v160
    %v185 = vunpack.c.l.b16 %v161
    %v186 = vunpack.c.l.b16 %v162
    %v187 = vunpack.c.l.b16 %v163
    %v188 = vunpack.c.l.b16 %v164
    %v189 = vunpack.c.l.b16 %v165
    %v190 = vpack.c.b16 %v183, %v182
    %v191 = vpack.c.b16 %v185, %v184
    %v192 = vpack.c.b16 %v187, %v186
    %v193 = vpack.c.b16 %v189, %v188
    %vm198 = vcmask 523264
    %v200 = vsel %vm198, %v167, 0
    %202 = vmatprep.subr.bf16.mxu0 0
    %203 = vmatpush1.bf16.msra.mxu0 %v190
    %204 = vmatprep.subr.bf16.mxu0 0
    %205 = vmatpush1.bf16.msra.mxu0 %v191
    %206 = vmatprep.subr.bf16.mxu0 0
    %207 = vmatpush1.bf16.msra.mxu0 %v192
    %208 = vmatprep.subr.bf16.mxu0 0
    %209 = vmatpush1.bf16.msra.mxu0 %v193
    %210 = vmatprep.subr.bf16.mxu0 0
    %211 = vmatpush1.bf16.msra.mxu0 0
    %212 = vmatprep.subr.bf16.mxu0 0
    %213 = vmatpush1.bf16.msra.mxu0 0
    %214 = vmatprep.subr.bf16.mxu0 0
    %215 = vmatpush1.bf16.msra.mxu0 0
    %216 = vmatprep.subr.bf16.mxu0 0
    %217 = vmatpush1.bf16.msra.mxu0 0
    %218 = vmatprep.subr.bf16.mxu0 0
    %219 = vmatpush1.bf16.msra.mxu0 0
    %220 = vmatprep.subr.bf16.mxu0 0
    %221 = vmatpush1.bf16.msra.mxu0 0
    %222 = vmatprep.subr.bf16.mxu0 0
    %223 = vmatpush1.bf16.msra.mxu0 0
    %224 = vmatprep.subr.bf16.mxu0 0
    %225 = vmatpush1.bf16.msra.mxu0 0
    %226 = vmatprep.subr.bf16.mxu0 0
    %227 = vmatpush1.bf16.msra.mxu0 0
    %228 = vmatprep.subr.bf16.mxu0 0
    %229 = vmatpush1.bf16.msra.mxu0 0
    %230 = vmatprep.subr.bf16.mxu0 0
    %231 = vmatpush1.bf16.msra.mxu0 0
    %232 = vmatprep.subr.bf16.mxu0 0
    %233 = vmatpush1.bf16.msra.mxu0 0
    %234 = vmatprep.mubr.bf16.mxu0 0
    %235 = vmatmul.mubr.bf16.gmra.mrb[0].mxu0 %v200
    %v236 = vpop.f32.mrb[0].mxu0
    %v237 = vadd.f32 %v172, %v236
    %v238 = vpop.f32.mrb[0].mxu0
    %v239 = vpop.f32.mrb[0].mxu0
    %v240 = vadd.f32 %v172, %v239
    %v241 = vpop.f32.mrb[0].mxu0
    %242 = vdwg.mxu0
    %v243 = vmax.f32 %v237, 0.0
    %v244 = vmax.f32 %v240, 0.0
    %v245 = vld [vmem:[%s5] sm:$0xf]
    %v246 = vld [vmem:[%s5 + $0x4] sm:$0xf]
    %v247 = vld [vmem:[%s5 + $0x8] sm:$0xf]
    %v248 = vld [vmem:[%s5 + $0xc] sm:$0xf]
    %v249 = vld [vmem:[%s6] sm:$0x1]
    %v250 = vpack.c.bf16 %v244, %v243
    %v252 = vlaneseq
    %v253 = vshrl.u32 %v252, 7
    %v254 = vsub.s32 0, %v253
    %v255 = vrot.slane %v249, %v254
    %v261 = vunpack.c.l.b16 %v245
    %v262 = vunpack.c.l.b16 %v246
    %v263 = vunpack.c.l.b16 %v247
    %v264 = vunpack.c.l.b16 %v248
    %v265 = vpack.c.b16 %v262, %v261
    %v266 = vpack.c.b16 %v264, %v263
    %vm269 = vcmask 261120
    %v271 = vsel %vm269, %v250, 0
    %273 = vmatprep.subr.bf16.mxu0 0
    %274 = vmatpush1.bf16.msra.mxu0 %v265
    %275 = vmatprep.subr.bf16.mxu0 0
    %276 = vmatpush1.bf16.msra.mxu0 %v266
    %277 = vmatprep.subr.bf16.mxu0 0
    %278 = vmatpush1.bf16.msra.mxu0 0
    %279 = vmatprep.subr.bf16.mxu0 0
    %280 = vmatpush1.bf16.msra.mxu0 0
    %281 = vmatprep.subr.bf16.mxu0 0
    %282 = vmatpush1.bf16.msra.mxu0 0
    %283 = vmatprep.subr.bf16.mxu0 0
    %284 = vmatpush1.bf16.msra.mxu0 0
    %285 = vmatprep.subr.bf16.mxu0 0
    %286 = vmatpush1.bf16.msra.mxu0 0
    %287 = vmatprep.subr.bf16.mxu0 0
    %288 = vmatpush1.bf16.msra.mxu0 0
    %289 = vmatprep.subr.bf16.mxu0 0
    %290 = vmatpush1.bf16.msra.mxu0 0
    %291 = vmatprep.subr.bf16.mxu0 0
    %292 = vmatpush1.bf16.msra.mxu0 0
    %293 = vmatprep.subr.bf16.mxu0 0
    %294 = vmatpush1.bf16.msra.mxu0 0
    %295 = vmatprep.subr.bf16.mxu0 0
    %296 = vmatpush1.bf16.msra.mxu0 0
    %297 = vmatprep.subr.bf16.mxu0 0
    %298 = vmatpush1.bf16.msra.mxu0 0
    %299 = vmatprep.subr.bf16.mxu0 0
    %300 = vmatpush1.bf16.msra.mxu0 0
    %301 = vmatprep.subr.bf16.mxu0 0
    %302 = vmatpush1.bf16.msra.mxu0 0
    %303 = vmatprep.subr.bf16.mxu0 0
    %304 = vmatpush1.bf16.msra.mxu0 0
    %305 = vmatprep.mubr.bf16.mxu0 0
    %306 = vmatmul.mubr.bf16.gmra.mrb[0].mxu0 %v271
    %v307 = vpop.f32.mrb[0].mxu0
    %v308 = vadd.f32 %v255, %v307
    %v309 = vpop.f32.mrb[0].mxu0
    %v310 = vpop.f32.mrb[0].mxu0
    %v311 = vadd.f32 %v255, %v310
    %v312 = vpop.f32.mrb[0].mxu0
    %313 = vdwg.mxu0
    %v314 = vmax.f32 %v308, 0.0
    %v315 = vmax.f32 %v311, 0.0
    %v316 = vld [vmem:[%s7] sm:$0xf]
    %v317 = vld [vmem:[%s7 + $0x4] sm:$0xf]
    %v318 = vld [vmem:[%s7 + $0x8] sm:$0xf]
    %v319 = vld [vmem:[%s7 + $0xc] sm:$0xf]
    %v320 = vld [vmem:[%s7 + $0x10] sm:$0xf]
    %v321 = vld [vmem:[%s7 + $0x14] sm:$0xf]
    %v322 = vld [vmem:[%s7 + $0x18] sm:$0xf]
    %v323 = vld [vmem:[%s7 + $0x1c] sm:$0xf]
    %v324 = vld [vmem:[%s8] sm:$0x1]
    %v325 = vpack.c.bf16 %v315, %v314
    %v327 = vlaneseq
    %v328 = vshrl.u32 %v327, 7
    %v329 = vsub.s32 0, %v328
    %v330 = vrot.slane %v324, %v329
    %v340 = vunpack.c.l.b16 %v316
    %v341 = vunpack.c.l.b16 %v317
    %v342 = vunpack.c.l.b16 %v318
    %v343 = vunpack.c.l.b16 %v319
    %v344 = vunpack.c.l.b16 %v320
    %v345 = vunpack.c.l.b16 %v321
    %v346 = vunpack.c.l.b16 %v322
    %v347 = vunpack.c.l.b16 %v323
    %v348 = vpack.c.b16 %v341, %v340
    %v349 = vpack.c.b16 %v343, %v342
    %v350 = vpack.c.b16 %v345, %v344
    %v351 = vpack.c.b16 %v347, %v346
    %v357 = vsel %vm198, %v325, 0
    %359 = vmatprep.subr.bf16.mxu0 0
    %360 = vmatpush1.bf16.msra.mxu0 %v348
    %361 = vmatprep.subr.bf16.mxu0 0
    %362 = vmatpush1.bf16.msra.mxu0 %v349
    %363 = vmatprep.subr.bf16.mxu0 0
    %364 = vmatpush1.bf16.msra.mxu0 %v350
    %365 = vmatprep.subr.bf16.mxu0 0
    %366 = vmatpush1.bf16.msra.mxu0 %v351
    %367 = vmatprep.subr.bf16.mxu0 0
    %368 = vmatpush1.bf16.msra.mxu0 0
    %369 = vmatprep.subr.bf16.mxu0 0
    %370 = vmatpush1.bf16.msra.mxu0 0
    %371 = vmatprep.subr.bf16.mxu0 0
    %372 = vmatpush1.bf16.msra.mxu0 0
    %373 = vmatprep.subr.bf16.mxu0 0
    %374 = vmatpush1.bf16.msra.mxu0 0
    %375 = vmatprep.subr.bf16.mxu0 0
    %376 = vmatpush1.bf16.msra.mxu0 0
    %377 = vmatprep.subr.bf16.mxu0 0
    %378 = vmatpush1.bf16.msra.mxu0 0
    %379 = vmatprep.subr.bf16.mxu0 0
    %380 = vmatpush1.bf16.msra.mxu0 0
    %381 = vmatprep.subr.bf16.mxu0 0
    %382 = vmatpush1.bf16.msra.mxu0 0
    %383 = vmatprep.subr.bf16.mxu0 0
    %384 = vmatpush1.bf16.msra.mxu0 0
    %385 = vmatprep.subr.bf16.mxu0 0
    %386 = vmatpush1.bf16.msra.mxu0 0
    %387 = vmatprep.subr.bf16.mxu0 0
    %388 = vmatpush1.bf16.msra.mxu0 0
    %389 = vmatprep.subr.bf16.mxu0 0
    %390 = vmatpush1.bf16.msra.mxu0 0
    %391 = vmatprep.mubr.bf16.mxu0 0
    %392 = vmatmul.mubr.bf16.gmra.mrb[0].mxu0 %v357
    %v393 = vpop.f32.mrb[0].mxu0
    %v394 = vadd.f32 %v330, %v393
    %v395 = vpop.f32.mrb[0].mxu0
    %v396 = vpop.f32.mrb[0].mxu0
    %v397 = vadd.f32 %v330, %v396
    %v398 = vpop.f32.mrb[0].mxu0
    %399 = vdwg.mxu0
    %400 = vst [vmem:[#allocation2] sm:$0xff] %v394
    %401 = vst [vmem:[#allocation2 + $0x8] sm:$0xff] %v397
    // Predicated region
    $region38: #{tpu_custom_call.1} parent=1 // pred_check
      _
    $region39: #{tpu_custom_call.1} parent=1 // pred_check_branch
      %403 = sbr.rel (0) target = $region41
    $region40: #{tpu_custom_call.1} parent=1 // pred_region
      %s405 = ssub.s32 256, 256
      %406 = vsyncadd [#allocation3], %s405
      %s407 = sshll.u32 [#allocation2], 4
      %s408 = int_to_ptr.vmem [resolvable:$true] %s407
      %413 = dma.vmem_to_hbm [thread:$0]  %s408, 256, %s9, [#allocation3], 128, 128, 8
    $region41: #{tpu_custom_call.1} parent=1 // pred_fallthru
      _
    // Predicated region
    $region42: #{tpu_custom_call.1} parent=1 // pred_check
      _
    $region43: #{tpu_custom_call.1} parent=1 // pred_check_branch
      %415 = sbr.rel (0) target = $region45
    $region44: #{tpu_custom_call.1} parent=1 // pred_region
      %416 = dma.done [#allocation3], 256
    $region45: #{tpu_custom_call.1} parent=1 // pred_fallthru
      _
    %417 = vsyncpa [#allocation3], 1

</llo_original>
